<compile_context>
chip_gen: v6e
topology: v6e:2x2x1
jax: 0.10.0
libtpu: 0.0.40
codegen_flags: <defaults>
</compile_context>

<pallas_src>
import jax
import jax.numpy as jnp
from jax.experimental import pallas as pl
from jax.experimental.pallas import tpu as pltpu

BN_EPS = 1e-5


def _simple_dnn_kernel(x_ref,
                       w1_ref, b1_ref,
                       w2_ref, b2_ref,
                       w3_ref, b3_ref,
                       out_ref):
    # All operands f32; matmuls accumulate in f32 on the MXU.  The kernel is
    # HBM-bound, so MXU precision passes and VPU work ride in slack.
    h = jnp.dot(x_ref[...], w1_ref[...],
                preferred_element_type=jnp.float32) + b1_ref[...]
    h = jnp.maximum(h, 0.0)

    h = jnp.dot(h, w2_ref[...],
                preferred_element_type=jnp.float32) + b2_ref[...]
    h = jnp.maximum(h, 0.0)

    out = jnp.dot(h, w3_ref[...],
                  preferred_element_type=jnp.float32) + b3_ref[...]
    out_ref[...] = out.astype(out_ref.dtype)


def fold_bn_params(params):
    """Fold the eval-mode BatchNorms into the *following* Linear layers.

    The ReLU sits between Linear and BN, so BN folds forward, not back:
        s = g * rsqrt(v + eps);  W_next' = diag(s) @ W_next
        b_next' = b_next + (beta - m * s) @ W_next
    Call ONCE per parameter set and reuse the result for every forward call
    (keeps rsqrt/pads/casts out of the per-call path).
    """
    s1 = params["g1"] * jax.lax.rsqrt(params["v1"] + BN_EPS)      # (1, h1)
    t1 = params["be1"] - params["m1"] * s1                         # (1, h1)
    w2f = params["w2"] * s1.T                                      # scale rows
    b2f = params["b2"] + t1 @ params["w2"]

    s2 = params["g2"] * jax.lax.rsqrt(params["v2"] + BN_EPS)       # (1, h2)
    t2 = params["be2"] - params["m2"] * s2
    w3f = params["w3"] * s2.T
    b3f = params["b3"] + t2 @ params["w3"]

    f32 = jnp.float32
    return {
        "w1": params["w1"].astype(f32), "b1": params["b1"].astype(f32),
        "w2": w2f.astype(f32), "b2": b2f.astype(f32),
        "w3": w3f.astype(f32), "b3": b3f.astype(f32),
    }


def simple_dnn_forward(x, folded, *, block_b=4096):
    """x: [B, input_size] float32.  folded: dict from fold_bn_params."""
    B, in_dim = x.shape
    h1 = folded["w1"].shape[1]
    h2 = folded["w2"].shape[1]
    n_classes = folded["w3"].shape[1]

    # Batch tile: whole batch in one step if it fits, else block_b rows
    # (multiple of 8 for f32 sublane packing).  No explicit padding; Pallas
    # handles the partial last block.
    if B <= block_b:
        eff_b = B
    else:
        eff_b = max(8, (block_b // 8) * 8)
    grid_b = pl.cdiv(B, eff_b)

    weights = [folded["w1"], folded["b1"],
               folded["w2"], folded["b2"],
               folded["w3"], folded["b3"]]

    def full_spec(arr):
        # Whole-array block, replicated across the batch grid.
        return pl.BlockSpec(arr.shape, lambda i: (0, 0))

    in_specs = [pl.BlockSpec((eff_b, in_dim), lambda i: (i, 0))]
    in_specs += [full_spec(a) for a in weights]

    weight_bytes = sum(int(a.size) * a.dtype.itemsize for a in weights)
    cost = pl.CostEstimate(
        flops=2 * B * (in_dim * h1 + h1 * h2 + h2 * n_classes),
        transcendentals=0,
        bytes_accessed=B * (in_dim + n_classes) * 4 + weight_bytes,
    )

    return pl.pallas_call(
        _simple_dnn_kernel,
        out_shape=jax.ShapeDtypeStruct((B, n_classes), jnp.float32),
        grid_spec=pltpu.PrefetchScalarGridSpec(
            num_scalar_prefetch=0,
            grid=(grid_b,),
            in_specs=in_specs,
            out_specs=pl.BlockSpec((eff_b, n_classes), lambda i: (i, 0)),
        ),
        compiler_params=pltpu.CompilerParams(
            dimension_semantics=("parallel",)),
        cost_estimate=cost,
    )(x, *weights)


def init_simple_dnn_params(key, input_size, hidden_size, n_classes):
    """Deterministic init mirroring nn.Linear / nn.BatchNorm1d __init__."""
    hs = hidden_size if isinstance(hidden_size, list) else [hidden_size]
    dims = [input_size] + hs + [n_classes]
    params = {}

    def linear(key, fan_in, fan_out):
        kw, kb = jax.random.split(key)
        bound = 1.0 / jnp.sqrt(fan_in)
        # stored as (in, out): transpose of PyTorch's (out, in)
        w = jax.random.uniform(kw, (fan_in, fan_out), jnp.float32, -bound, bound)
        b = jax.random.uniform(kb, (1, fan_out), jnp.float32, -bound, bound)
        return w, b

    keys = jax.random.split(key, len(dims) - 1)
    for li in range(len(hs)):
        w, b = linear(keys[li], dims[li], dims[li + 1])
        n = dims[li + 1]
        params[f"w{li + 1}"] = w
        params[f"b{li + 1}"] = b
        params[f"g{li + 1}"] = jnp.ones((1, n), jnp.float32)    # BN weight
        params[f"be{li + 1}"] = jnp.zeros((1, n), jnp.float32)  # BN bias
        params[f"m{li + 1}"] = jnp.zeros((1, n), jnp.float32)   # running_mean
        params[f"v{li + 1}"] = jnp.ones((1, n), jnp.float32)    # running_var
    w, b = linear(keys[-1], dims[-2], dims[-1])
    params[f"w{len(hs) + 1}"] = w
    params[f"b{len(hs) + 1}"] = b
    return params


def reference_forward(x, params):
    """Pure-JAX f32 reference of the original (unfolded) eval-mode forward."""
    h = x @ params["w1"] + params["b1"]
    h = jnp.maximum(h, 0.0)
    h = (h - params["m1"]) / jnp.sqrt(params["v1"] + BN_EPS) * params["g1"] + params["be1"]
    h = h @ params["w2"] + params["b2"]
    h = jnp.maximum(h, 0.0)
    h = (h - params["m2"]) / jnp.sqrt(params["v2"] + BN_EPS) * params["g2"] + params["be2"]
    return h @ params["w3"] + params["b3"]


if __name__ == "__main__":
    input_size, hidden_size, n_classes = 32, [64, 32], 8
    batch = 64

    key = jax.random.PRNGKey(0)
    kx, kp, kbn = jax.random.split(key, 3)
    x = jax.random.normal(kx, (batch, input_size), jnp.float32)
    params = init_simple_dnn_params(kp, input_size, hidden_size, n_classes)

    # Non-trivial eval-mode BN statistics so the folding is actually exercised.
    ks = jax.random.split(kbn, 8)
    for li, n in zip((1, 2), (hidden_size[0], hidden_size[1])):
        o = 4 * (li - 1)
        params[f"m{li}"] = 0.3 * jax.random.normal(ks[o + 0], (1, n), jnp.float32)
        params[f"v{li}"] = 0.5 + jax.random.uniform(ks[o + 1], (1, n), jnp.float32)
        params[f"g{li}"] = 1.0 + 0.2 * jax.random.normal(ks[o + 2], (1, n), jnp.float32)
        params[f"be{li}"] = 0.1 * jax.random.normal(ks[o + 3], (1, n), jnp.float32)

    folded = fold_bn_params(params)          # fold BN + prep weights ONCE
    ref = reference_forward(x, params)

    # 1) whole batch in a single tile (grid length 1)
    out = jax.block_until_ready(simple_dnn_forward(x, folded))
    assert out.shape == (batch, n_classes)
    assert jnp.allclose(out, ref, atol=1e-3, rtol=1e-3), "mismatch (single tile)"

    # 2) tiled path with a partial last block (block_b=24 -> grid of 3, 16-row tail)
    out_t = jax.block_until_ready(simple_dnn_forward(x, folded, block_b=24))
    assert jnp.allclose(out_t, ref, atol=1e-3, rtol=1e-3), "mismatch (tiled)"

    print("KERNEL_OK")
</pallas_src>

<mosaic_0001>
module attributes {stable_mosaic.version = 11 : i64} {
  func.func @_simple_dnn_kernel(%arg0: i32, %arg1: memref<64x32xf32, #tpu.memory_space<vmem>>, %arg2: memref<32x64xf32, #tpu.memory_space<vmem>>, %arg3: memref<1x64xf32, #tpu.memory_space<vmem>>, %arg4: memref<64x32xf32, #tpu.memory_space<vmem>>, %arg5: memref<1x32xf32, #tpu.memory_space<vmem>>, %arg6: memref<32x8xf32, #tpu.memory_space<vmem>>, %arg7: memref<1x8xf32, #tpu.memory_space<vmem>>, %arg8: memref<64x8xf32, #tpu.memory_space<vmem>>) attributes {dimension_semantics = [#tpu.dimension_semantics<parallel>], iteration_bounds = array<i64: 1>, scalar_prefetch = 0 : i64, scratch_operands = 0 : i64, tpu.core_type = #tpu.core_type<tc>, window_params = [{transform_indices = @transform_0, window_bounds = array<i64: 64, 32>}, {pipeline_mode = #tpu.pipeline_mode<synchronous>, transform_indices = @transform_1, window_bounds = array<i64: 32, 64>}, {pipeline_mode = #tpu.pipeline_mode<synchronous>, transform_indices = @transform_2, window_bounds = array<i64: 1, 64>}, {pipeline_mode = #tpu.pipeline_mode<synchronous>, transform_indices = @transform_3, window_bounds = array<i64: 64, 32>}, {pipeline_mode = #tpu.pipeline_mode<synchronous>, transform_indices = @transform_4, window_bounds = array<i64: 1, 32>}, {pipeline_mode = #tpu.pipeline_mode<synchronous>, transform_indices = @transform_5, window_bounds = array<i64: 32, 8>}, {pipeline_mode = #tpu.pipeline_mode<synchronous>, transform_indices = @transform_6, window_bounds = array<i64: 1, 8>}, {transform_indices = @transform_7, window_bounds = array<i64: 64, 8>}]} {
    %c0 = arith.constant 0 : index
    %c0_0 = arith.constant 0 : index
    %0 = vector.load %arg1[%c0, %c0_0] : memref<64x32xf32, #tpu.memory_space<vmem>>, vector<64x32xf32>
    %c0_1 = arith.constant 0 : index
    %c0_2 = arith.constant 0 : index
    %1 = vector.load %arg2[%c0_1, %c0_2] : memref<32x64xf32, #tpu.memory_space<vmem>>, vector<32x64xf32>
    %cst = arith.constant dense<0.000000e+00> : vector<64x64xf32>
    %2 = tpu.matmul %0, %1, %cst {dimension_numbers = #tpu.dot_dimension_numbers<[1], [0], [0], [1], [0, 0, 1, 1], [], []>} : vector<64x32xf32>, vector<32x64xf32>, vector<64x64xf32> -> vector<64x64xf32>
    %c0_3 = arith.constant 0 : index
    %c0_4 = arith.constant 0 : index
    %3 = vector.load %arg3[%c0_3, %c0_4] : memref<1x64xf32, #tpu.memory_space<vmem>>, vector<1x64xf32>
    %4 = vector.broadcast %3 : vector<1x64xf32> to vector<64x64xf32>
    %5 = arith.addf %2, %4 : vector<64x64xf32>
    %cst_5 = arith.constant 0.000000e+00 : f32
    %6 = vector.broadcast %cst_5 : f32 to vector<64x64xf32>
    %7 = arith.maximumf %5, %6 : vector<64x64xf32>
    %c0_6 = arith.constant 0 : index
    %c0_7 = arith.constant 0 : index
    %8 = vector.load %arg4[%c0_6, %c0_7] : memref<64x32xf32, #tpu.memory_space<vmem>>, vector<64x32xf32>
    %cst_8 = arith.constant dense<0.000000e+00> : vector<64x32xf32>
    %9 = tpu.matmul %7, %8, %cst_8 {dimension_numbers = #tpu.dot_dimension_numbers<[1], [0], [0], [1], [0, 0, 1, 1], [], []>} : vector<64x64xf32>, vector<64x32xf32>, vector<64x32xf32> -> vector<64x32xf32>
    %c0_9 = arith.constant 0 : index
    %c0_10 = arith.constant 0 : index
    %10 = vector.load %arg5[%c0_9, %c0_10] : memref<1x32xf32, #tpu.memory_space<vmem>>, vector<1x32xf32>
    %11 = vector.broadcast %10 : vector<1x32xf32> to vector<64x32xf32>
    %12 = arith.addf %9, %11 : vector<64x32xf32>
    %cst_11 = arith.constant 0.000000e+00 : f32
    %13 = vector.broadcast %cst_11 : f32 to vector<64x32xf32>
    %14 = arith.maximumf %12, %13 : vector<64x32xf32>
    %c0_12 = arith.constant 0 : index
    %c0_13 = arith.constant 0 : index
    %15 = vector.load %arg6[%c0_12, %c0_13] : memref<32x8xf32, #tpu.memory_space<vmem>>, vector<32x8xf32>
    %cst_14 = arith.constant dense<0.000000e+00> : vector<64x8xf32>
    %16 = tpu.matmul %14, %15, %cst_14 {dimension_numbers = #tpu.dot_dimension_numbers<[1], [0], [0], [1], [0, 0, 1, 1], [], []>} : vector<64x32xf32>, vector<32x8xf32>, vector<64x8xf32> -> vector<64x8xf32>
    %c0_15 = arith.constant 0 : index
    %c0_16 = arith.constant 0 : index
    %17 = vector.load %arg7[%c0_15, %c0_16] : memref<1x8xf32, #tpu.memory_space<vmem>>, vector<1x8xf32>
    %18 = vector.broadcast %17 : vector<1x8xf32> to vector<64x8xf32>
    %19 = arith.addf %16, %18 : vector<64x8xf32>
    %c0_17 = arith.constant 0 : index
    %c0_18 = arith.constant 0 : index
    %20 = vector.load %arg8[%c0_17, %c0_18] : memref<64x8xf32, #tpu.memory_space<vmem>>, vector<64x8xf32>
    tpu.vector_store %arg8[%c0_17, %c0_18], %19 {strides = array<i32>} : memref<64x8xf32, #tpu.memory_space<vmem>>, vector<64x8xf32>,
    return
  }
  func.func @transform_0(%arg0: i32) -> (i32, i32) {
    %c0_i32 = arith.constant 0 : i32
    %c0_i32_0 = arith.constant 0 : i32
    return %arg0, %c0_i32 : i32, i32
  }
  func.func @transform_1(%arg0: i32) -> (i32, i32) {
    %c0_i32 = arith.constant 0 : i32
    %c0_i32_0 = arith.constant 0 : i32
    %c0_i32_1 = arith.constant 0 : i32
    return %c0_i32, %c0_i32_0 : i32, i32
  }
  func.func @transform_2(%arg0: i32) -> (i32, i32) {
    %c0_i32 = arith.constant 0 : i32
    %c0_i32_0 = arith.constant 0 : i32
    %c0_i32_1 = arith.constant 0 : i32
    return %c0_i32, %c0_i32_0 : i32, i32
  }
  func.func @transform_3(%arg0: i32) -> (i32, i32) {
    %c0_i32 = arith.constant 0 : i32
    %c0_i32_0 = arith.constant 0 : i32
    %c0_i32_1 = arith.constant 0 : i32
    return %c0_i32, %c0_i32_0 : i32, i32
  }
  func.func @transform_4(%arg0: i32) -> (i32, i32) {
    %c0_i32 = arith.constant 0 : i32
    %c0_i32_0 = arith.constant 0 : i32
    %c0_i32_1 = arith.constant 0 : i32
    return %c0_i32, %c0_i32_0 : i32, i32
  }
  func.func @transform_5(%arg0: i32) -> (i32, i32) {
    %c0_i32 = arith.constant 0 : i32
    %c0_i32_0 = arith.constant 0 : i32
    %c0_i32_1 = arith.constant 0 : i32
    return %c0_i32, %c0_i32_0 : i32, i32
  }
  func.func @transform_6(%arg0: i32) -> (i32, i32) {
    %c0_i32 = arith.constant 0 : i32
    %c0_i32_0 = arith.constant 0 : i32
    %c0_i32_1 = arith.constant 0 : i32
    return %c0_i32, %c0_i32_0 : i32, i32
  }
  func.func @transform_7(%arg0: i32) -> (i32, i32) {
    %c0_i32 = arith.constant 0 : i32
    %c0_i32_0 = arith.constant 0 : i32
    return %arg0, %c0_i32 : i32, i32
  }
}

</mosaic_0001>

<llo_original>
// kernel: tpu_custom_call.1
$region0: #{tpu_custom_call.1}
  #allocation0 [shape = 'u32[]', space=smem, size = 0x4, offset = 0x4, fixed_abs, tag = 'smem constant byte address 0x4 - core index']
  #allocation1 [shape = 'u32[144,128]{1,0:T(1,128)}', space=vmem, size = 0x12000, scoped, tag = 'internal scratch']
  %s0 = inlined_call_operand.vmem [shape: f32[64,32], index: 0, kind: input, shape index: {}]
  %s1 = inlined_call_operand.vmem [shape: f32[32,64], index: 1, kind: input, shape index: {}]
  %s2 = inlined_call_operand.vmem [shape: f32[1,64], index: 2, kind: input, shape index: {}]
  %s3 = inlined_call_operand.vmem [shape: f32[64,32], index: 3, kind: input, shape index: {}]
  %s4 = inlined_call_operand.vmem [shape: f32[1,32], index: 4, kind: input, shape index: {}]
  %s5 = inlined_call_operand.vmem [shape: f32[32,8], index: 5, kind: input, shape index: {}]
  %s6 = inlined_call_operand.vmem [shape: f32[1,8], index: 6, kind: input, shape index: {}]
  %s7 = inlined_call_operand.vmem [shape: f32[64,8], index: 7, kind: output, shape index: {}]
  %s8 = sld [smem:[#allocation0]]
  $region38: #{tpu_custom_call.1} parent=0
    _
  %s10 = ssub.s32 1, %s8
  %s11 = scalar_select 0, %s10, %s8
  // Predicated region
  $region2: #{tpu_custom_call.1} parent=0 // pred_check
    _
  $region3: #{tpu_custom_call.1} parent=0 // pred_check_branch
    %13 = sbr.rel (0) target = $region5
  $region4: #{tpu_custom_call.1} parent=0 // pred_region
    _
  $region5: #{tpu_custom_call.1} parent=0 // pred_fallthru
    _
  // Predicated region
  $region6: #{tpu_custom_call.1} parent=0 // pred_check
    _
  $region7: #{tpu_custom_call.1} parent=0 // pred_check_branch
    %15 = sbr.rel (0) target = $region9
  $region8: #{tpu_custom_call.1} parent=0 // pred_region
    _
  $region9: #{tpu_custom_call.1} parent=0 // pred_fallthru
    _
  // Predicated region
  $region10: #{tpu_custom_call.1} parent=0 // pred_check
    _
  $region11: #{tpu_custom_call.1} parent=0 // pred_check_branch
    %17 = sbr.rel (0) target = $region13
  $region12: #{tpu_custom_call.1} parent=0 // pred_region
    _
  $region13: #{tpu_custom_call.1} parent=0 // pred_fallthru
    _
  // Predicated region
  $region14: #{tpu_custom_call.1} parent=0 // pred_check
    _
  $region15: #{tpu_custom_call.1} parent=0 // pred_check_branch
    %19 = sbr.rel (0) target = $region17
  $region16: #{tpu_custom_call.1} parent=0 // pred_region
    _
  $region17: #{tpu_custom_call.1} parent=0 // pred_fallthru
    _
  // Predicated region
  $region18: #{tpu_custom_call.1} parent=0 // pred_check
    _
  $region19: #{tpu_custom_call.1} parent=0 // pred_check_branch
    %21 = sbr.rel (0) target = $region21
  $region20: #{tpu_custom_call.1} parent=0 // pred_region
    _
  $region21: #{tpu_custom_call.1} parent=0 // pred_fallthru
    _
  // Predicated region
  $region22: #{tpu_custom_call.1} parent=0 // pred_check
    _
  $region23: #{tpu_custom_call.1} parent=0 // pred_check_branch
    %23 = sbr.rel (0) target = $region25
  $region24: #{tpu_custom_call.1} parent=0 // pred_region
    _
  $region25: #{tpu_custom_call.1} parent=0 // pred_fallthru
    _
  // Predicated region
  $region26: #{tpu_custom_call.1} parent=0 // pred_check
    _
  $region27: #{tpu_custom_call.1} parent=0 // pred_check_branch
    %25 = sbr.rel (0) target = $region29
  $region28: #{tpu_custom_call.1} parent=0 // pred_region
    _
  $region29: #{tpu_custom_call.1} parent=0 // pred_fallthru
    _
  %v26 = vld [vmem:[%s0] sm:$0xff]
  %v27 = vld [vmem:[%s0 + $0x8] sm:$0xff]
  %v28 = vld [vmem:[%s0 + $0x10] sm:$0xff]
  %v29 = vld [vmem:[%s0 + $0x18] sm:$0xff]
  %v30 = vld [vmem:[%s0 + $0x20] sm:$0xff]
  %v31 = vld [vmem:[%s0 + $0x28] sm:$0xff]
  %v32 = vld [vmem:[%s0 + $0x30] sm:$0xff]
  %v33 = vld [vmem:[%s0 + $0x38] sm:$0xff]
  %v34 = vld [vmem:[%s1] sm:$0xff]
  %v35 = vld [vmem:[%s1 + $0x8] sm:$0xff]
  %v36 = vld [vmem:[%s1 + $0x10] sm:$0xff]
  %v37 = vld [vmem:[%s1 + $0x18] sm:$0xff]
  %v38 = vld [vmem:[%s2] sm:$0x1]
  %v40 = vlaneseq
  %v41 = vshrl.u32 %v40, 7
  %v42 = vsub.s32 0, %v41
  %v43 = vrot.slane %v38, %v42
  %vm45 = vcmask 261120
  %v47 = vsel %vm45, %v26, 0
  %v50 = vsel %vm45, %v27, 0
  %v53 = vsel %vm45, %v28, 0
  %v56 = vsel %vm45, %v29, 0
  %v59 = vsel %vm45, %v30, 0
  %v62 = vsel %vm45, %v31, 0
  %v65 = vsel %vm45, %v32, 0
  %v68 = vsel %vm45, %v33, 0
  %70 = vmatprep.subr.mxu0 0.0
  %71 = vmatpush1.msra.mxu0 0.0
  %72 = vmatprep.subr.mxu0 0.0
  %73 = vmatpush1.msra.mxu0 0.0
  %74 = vmatprep.subr.mxu0 0.0
  %75 = vmatpush1.msra.mxu0 0.0
  %76 = vmatprep.subr.mxu0 0.0
  %77 = vmatpush1.msra.mxu0 0.0
  %78 = vmatprep.subr.mxu0 0.0
  %79 = vmatpush1.msra.mxu0 0.0
  %80 = vmatprep.subr.mxu0 0.0
  %81 = vmatpush1.msra.mxu0 0.0
  %82 = vmatprep.subr.mxu0 0.0
  %83 = vmatpush1.msra.mxu0 0.0
  %84 = vmatprep.subr.mxu0 0.0
  %85 = vmatpush1.msra.mxu0 0.0
  %86 = vmatprep.subr.mxu0 0.0
  %87 = vmatpush1.msra.mxu0 0.0
  %88 = vmatprep.subr.mxu0 0.0
  %89 = vmatpush1.msra.mxu0 0.0
  %90 = vmatprep.subr.mxu0 0.0
  %91 = vmatpush1.msra.mxu0 0.0
  %92 = vmatprep.subr.mxu0 0.0
  %93 = vmatpush1.msra.mxu0 0.0
  %94 = vmatprep.subr.mxu0 0.0
  %95 = vmatpush1.msra.mxu0 %v37
  %96 = vmatprep.subr.mxu0 0.0
  %97 = vmatpush1.msra.mxu0 %v36
  %98 = vmatprep.subr.mxu0 0.0
  %99 = vmatpush1.msra.mxu0 %v35
  %100 = vmatprep.subr.mxu0 0.0
  %101 = vmatpush1.msra.mxu0 %v34
  %102 = vmatprep.subr.mxu0 0.0
  %103 = vmatpush2.msra.mxu0 0.0
  %104 = vmatprep.subr.mxu0 0.0
  %105 = vmatpush2.msra.mxu0 0.0
  %106 = vmatprep.subr.mxu0 0.0
  %107 = vmatpush2.msra.mxu0 0.0
  %108 = vmatprep.subr.mxu0 0.0
  %109 = vmatpush2.msra.mxu0 0.0
  %110 = vmatprep.subr.mxu0 0.0
  %111 = vmatpush2.msra.mxu0 0.0
  %112 = vmatprep.subr.mxu0 0.0
  %113 = vmatpush2.msra.mxu0 0.0
  %114 = vmatprep.subr.mxu0 0.0
  %115 = vmatpush2.msra.mxu0 0.0
  %116 = vmatprep.subr.mxu0 0.0
  %117 = vmatpush2.msra.mxu0 0.0
  %118 = vmatprep.subr.mxu0 0.0
  %119 = vmatpush2.msra.mxu0 0.0
  %120 = vmatprep.subr.mxu0 0.0
  %121 = vmatpush2.msra.mxu0 0.0
  %122 = vmatprep.subr.mxu0 0.0
  %123 = vmatpush2.msra.mxu0 0.0
  %124 = vmatprep.subr.mxu0 0.0
  %125 = vmatpush2.msra.mxu0 0.0
  %126 = vmatprep.subr.mxu0 0.0
  %127 = vmatpush2.msra.mxu0 0.0
  %128 = vmatprep.subr.mxu0 0.0
  %129 = vmatpush2.msra.mxu0 0.0
  %130 = vmatprep.subr.mxu0 0.0
  %131 = vmatpush2.msra.mxu0 0.0
  %132 = vmatprep.subr.mxu0 0.0
  %133 = vmatpush2.msra.mxu0 0.0
  %134 = vmatprep.mubr.f32.mxu0 0.0
  %135 = vmatmul.mubr.f32.gmra.mxu0 %v47
  %v136 = vpop.f32.mrf.mxu0
  %v137 = vadd.f32 %v43, %v136
  %v138 = vpop.f32.mrf.mxu0
  %139 = vmatprep.mubr.f32.mxu0 0.0
  %140 = vmatmul.mubr.f32.gmra.mxu0 %v50
  %v141 = vpop.f32.mrf.mxu0
  %v142 = vadd.f32 %v43, %v141
  %v143 = vpop.f32.mrf.mxu0
  %144 = vmatprep.mubr.f32.mxu0 0.0
  %145 = vmatmul.mubr.f32.gmra.mxu0 %v53
  %v146 = vpop.f32.mrf.mxu0
  %v147 = vadd.f32 %v43, %v146
  %v148 = vpop.f32.mrf.mxu0
  %149 = vmatprep.mubr.f32.mxu0 0.0
  %150 = vmatmul.mubr.f32.gmra.mxu0 %v56
  %v151 = vpop.f32.mrf.mxu0
  %v152 = vadd.f32 %v43, %v151
  %v153 = vpop.f32.mrf.mxu0
  %154 = vmatprep.mubr.f32.mxu0 0.0
  %155 = vmatmul.mubr.f32.gmra.mxu0 %v59
  %v156 = vpop.f32.mrf.mxu0
  %v157 = vadd.f32 %v43, %v156
  %v158 = vpop.f32.mrf.mxu0
  %159 = vmatprep.mubr.f32.mxu0 0.0
  %160 = vmatmul.mubr.f32.gmra.mxu0 %v62
  %v161 = vpop.f32.mrf.mxu0
  %v162 = vadd.f32 %v43, %v161
  %v163 = vpop.f32.mrf.mxu0
  %164 = vmatprep.mubr.f32.mxu0 0.0
  %165 = vmatmul.mubr.f32.gmra.mxu0 %v65
  %v166 = vpop.f32.mrf.mxu0
  %v167 = vadd.f32 %v43, %v166
  %v168 = vpop.f32.mrf.mxu0
  %169 = vmatprep.mubr.f32.mxu0 0.0
  %170 = vmatmul.mubr.f32.gmra.mxu0 %v68
  %v171 = vpop.f32.mrf.mxu0
  %v172 = vadd.f32 %v43, %v171
  %v173 = vpop.f32.mrf.mxu0
  %174 = vdwg.mxu0
  %v175 = vmax.f32 %v137, 0.0
  %v176 = vmax.f32 %v142, 0.0
  %v177 = vmax.f32 %v147, 0.0
  %v178 = vmax.f32 %v152, 0.0
  %v179 = vmax.f32 %v157, 0.0
  %v180 = vmax.f32 %v162, 0.0
  %v181 = vmax.f32 %v167, 0.0
  %v182 = vmax.f32 %v172, 0.0
  %v183 = vld [vmem:[%s3] sm:$0xff]
  %v184 = vld [vmem:[%s3 + $0x8] sm:$0xff]
  %v185 = vld [vmem:[%s3 + $0x10] sm:$0xff]
  %v186 = vld [vmem:[%s3 + $0x18] sm:$0xff]
  %v187 = vld [vmem:[%s3 + $0x20] sm:$0xff]
  %v188 = vld [vmem:[%s3 + $0x28] sm:$0xff]
  %v189 = vld [vmem:[%s3 + $0x30] sm:$0xff]
  %v190 = vld [vmem:[%s3 + $0x38] sm:$0xff]
  %v191 = vld [vmem:[%s4] sm:$0x1]
  %v193 = vlaneseq
  %v194 = vshrl.u32 %v193, 7
  %v195 = vsub.s32 0, %v194
  %v196 = vrot.slane %v191, %v195
  %vm198 = vcmask 523264
  %v200 = vsel %vm198, %v175, 0
  %v203 = vsel %vm198, %v176, 0
  %v206 = vsel %vm198, %v177, 0
  %v209 = vsel %vm198, %v178, 0
  %v212 = vsel %vm198, %v179, 0
  %v215 = vsel %vm198, %v180, 0
  %v218 = vsel %vm198, %v181, 0
  %v221 = vsel %vm198, %v182, 0
  %223 = vmatprep.subr.mxu0 0.0
  %224 = vmatpush1.msra.mxu0 0.0
  %225 = vmatprep.subr.mxu0 0.0
  %226 = vmatpush1.msra.mxu0 0.0
  %227 = vmatprep.subr.mxu0 0.0
  %228 = vmatpush1.msra.mxu0 0.0
  %229 = vmatprep.subr.mxu0 0.0
  %230 = vmatpush1.msra.mxu0 0.0
  %231 = vmatprep.subr.mxu0 0.0
  %232 = vmatpush1.msra.mxu0 0.0
  %233 = vmatprep.subr.mxu0 0.0
  %234 = vmatpush1.msra.mxu0 0.0
  %235 = vmatprep.subr.mxu0 0.0
  %236 = vmatpush1.msra.mxu0 0.0
  %237 = vmatprep.subr.mxu0 0.0
  %238 = vmatpush1.msra.mxu0 0.0
  %239 = vmatprep.subr.mxu0 0.0
  %240 = vmatpush1.msra.mxu0 %v190
  %241 = vmatprep.subr.mxu0 0.0
  %242 = vmatpush1.msra.mxu0 %v189
  %243 = vmatprep.subr.mxu0 0.0
  %244 = vmatpush1.msra.mxu0 %v188
  %245 = vmatprep.subr.mxu0 0.0
  %246 = vmatpush1.msra.mxu0 %v187
  %247 = vmatprep.subr.mxu0 0.0
  %248 = vmatpush1.msra.mxu0 %v186
  %249 = vmatprep.subr.mxu0 0.0
  %250 = vmatpush1.msra.mxu0 %v185
  %251 = vmatprep.subr.mxu0 0.0
  %252 = vmatpush1.msra.mxu0 %v184
  %253 = vmatprep.subr.mxu0 0.0
  %254 = vmatpush1.msra.mxu0 %v183
  %255 = vmatprep.subr.mxu0 0.0
  %256 = vmatpush2.msra.mxu0 0.0
  %257 = vmatprep.subr.mxu0 0.0
  %258 = vmatpush2.msra.mxu0 0.0
  %259 = vmatprep.subr.mxu0 0.0
  %260 = vmatpush2.msra.mxu0 0.0
  %261 = vmatprep.subr.mxu0 0.0
  %262 = vmatpush2.msra.mxu0 0.0
  %263 = vmatprep.subr.mxu0 0.0
  %264 = vmatpush2.msra.mxu0 0.0
  %265 = vmatprep.subr.mxu0 0.0
  %266 = vmatpush2.msra.mxu0 0.0
  %267 = vmatprep.subr.mxu0 0.0
  %268 = vmatpush2.msra.mxu0 0.0
  %269 = vmatprep.subr.mxu0 0.0
  %270 = vmatpush2.msra.mxu0 0.0
  %271 = vmatprep.subr.mxu0 0.0
  %272 = vmatpush2.msra.mxu0 0.0
  %273 = vmatprep.subr.mxu0 0.0
  %274 = vmatpush2.msra.mxu0 0.0
  %275 = vmatprep.subr.mxu0 0.0
  %276 = vmatpush2.msra.mxu0 0.0
  %277 = vmatprep.subr.mxu0 0.0
  %278 = vmatpush2.msra.mxu0 0.0
  %279 = vmatprep.subr.mxu0 0.0
  %280 = vmatpush2.msra.mxu0 0.0
  %281 = vmatprep.subr.mxu0 0.0
  %282 = vmatpush2.msra.mxu0 0.0
  %283 = vmatprep.subr.mxu0 0.0
  %284 = vmatpush2.msra.mxu0 0.0
  %285 = vmatprep.subr.mxu0 0.0
  %286 = vmatpush2.msra.mxu0 0.0
  %287 = vmatprep.mubr.f32.mxu0 0.0
  %288 = vmatmul.mubr.f32.gmra.mxu0 %v200
  %v289 = vpop.f32.mrf.mxu0
  %v290 = vadd.f32 %v196, %v289
  %v291 = vpop.f32.mrf.mxu0
  %292 = vmatprep.mubr.f32.mxu0 0.0
  %293 = vmatmul.mubr.f32.gmra.mxu0 %v203
  %v294 = vpop.f32.mrf.mxu0
  %v295 = vadd.f32 %v196, %v294
  %v296 = vpop.f32.mrf.mxu0
  %297 = vmatprep.mubr.f32.mxu0 0.0
  %298 = vmatmul.mubr.f32.gmra.mxu0 %v206
  %v299 = vpop.f32.mrf.mxu0
  %v300 = vadd.f32 %v196, %v299
  %v301 = vpop.f32.mrf.mxu0
  %302 = vmatprep.mubr.f32.mxu0 0.0
  %303 = vmatmul.mubr.f32.gmra.mxu0 %v209
  %v304 = vpop.f32.mrf.mxu0
  %v305 = vadd.f32 %v196, %v304
  %v306 = vpop.f32.mrf.mxu0
  %307 = vmatprep.mubr.f32.mxu0 0.0
  %308 = vmatmul.mubr.f32.gmra.mxu0 %v212
  %v309 = vpop.f32.mrf.mxu0
  %v310 = vadd.f32 %v196, %v309
  %v311 = vpop.f32.mrf.mxu0
  %312 = vmatprep.mubr.f32.mxu0 0.0
  %313 = vmatmul.mubr.f32.gmra.mxu0 %v215
  %v314 = vpop.f32.mrf.mxu0
  %v315 = vadd.f32 %v196, %v314
  %v316 = vpop.f32.mrf.mxu0
  %317 = vmatprep.mubr.f32.mxu0 0.0
  %318 = vmatmul.mubr.f32.gmra.mxu0 %v218
  %v319 = vpop.f32.mrf.mxu0
  %v320 = vadd.f32 %v196, %v319
  %v321 = vpop.f32.mrf.mxu0
  %322 = vmatprep.mubr.f32.mxu0 0.0
  %323 = vmatmul.mubr.f32.gmra.mxu0 %v221
  %v324 = vpop.f32.mrf.mxu0
  %v325 = vadd.f32 %v196, %v324
  %v326 = vpop.f32.mrf.mxu0
  %327 = vdwg.mxu0
  %v328 = vmax.f32 %v290, 0.0
  %v329 = vmax.f32 %v295, 0.0
  %v330 = vmax.f32 %v300, 0.0
  %v331 = vmax.f32 %v305, 0.0
  %v332 = vmax.f32 %v310, 0.0
  %v333 = vmax.f32 %v315, 0.0
  %v334 = vmax.f32 %v320, 0.0
  %v335 = vmax.f32 %v325, 0.0
  %v336 = vld [vmem:[%s5] sm:$0xff]
  %v337 = vld [vmem:[%s5 + $0x8] sm:$0xff]
  %v338 = vld [vmem:[%s5 + $0x10] sm:$0xff]
  %v339 = vld [vmem:[%s5 + $0x18] sm:$0xff]
  %v340 = vld [vmem:[%s6] sm:$0x1]
  %v342 = vlaneseq
  %v343 = vshrl.u32 %v342, 7
  %v344 = vsub.s32 0, %v343
  %v345 = vrot.slane %v340, %v344
  %v348 = vsel %vm45, %v328, 0
  %v351 = vsel %vm45, %v329, 0
  %v354 = vsel %vm45, %v330, 0
  %v357 = vsel %vm45, %v331, 0
  %v360 = vsel %vm45, %v332, 0
  %v363 = vsel %vm45, %v333, 0
  %v366 = vsel %vm45, %v334, 0
  %v369 = vsel %vm45, %v335, 0
  %371 = vmatprep.subr.mxu0 0.0
  %372 = vmatpush1.msra.mxu0 0.0
  %373 = vmatprep.subr.mxu0 0.0
  %374 = vmatpush1.msra.mxu0 0.0
  %375 = vmatprep.subr.mxu0 0.0
  %376 = vmatpush1.msra.mxu0 0.0
  %377 = vmatprep.subr.mxu0 0.0
  %378 = vmatpush1.msra.mxu0 0.0
  %379 = vmatprep.subr.mxu0 0.0
  %380 = vmatpush1.msra.mxu0 0.0
  %381 = vmatprep.subr.mxu0 0.0
  %382 = vmatpush1.msra.mxu0 0.0
  %383 = vmatprep.subr.mxu0 0.0
  %384 = vmatpush1.msra.mxu0 0.0
  %385 = vmatprep.subr.mxu0 0.0
  %386 = vmatpush1.msra.mxu0 0.0
  %387 = vmatprep.subr.mxu0 0.0
  %388 = vmatpush1.msra.mxu0 0.0
  %389 = vmatprep.subr.mxu0 0.0
  %390 = vmatpush1.msra.mxu0 0.0
  %391 = vmatprep.subr.mxu0 0.0
  %392 = vmatpush1.msra.mxu0 0.0
  %393 = vmatprep.subr.mxu0 0.0
  %394 = vmatpush1.msra.mxu0 0.0
  %395 = vmatprep.subr.mxu0 0.0
  %396 = vmatpush1.msra.mxu0 %v339
  %397 = vmatprep.subr.mxu0 0.0
  %398 = vmatpush1.msra.mxu0 %v338
  %399 = vmatprep.subr.mxu0 0.0
  %400 = vmatpush1.msra.mxu0 %v337
  %401 = vmatprep.subr.mxu0 0.0
  %402 = vmatpush1.msra.mxu0 %v336
  %403 = vmatprep.subr.mxu0 0.0
  %404 = vmatpush2.msra.mxu0 0.0
  %405 = vmatprep.subr.mxu0 0.0
  %406 = vmatpush2.msra.mxu0 0.0
  %407 = vmatprep.subr.mxu0 0.0
  %408 = vmatpush2.msra.mxu0 0.0
  %409 = vmatprep.subr.mxu0 0.0
  %410 = vmatpush2.msra.mxu0 0.0
  %411 = vmatprep.subr.mxu0 0.0
  %412 = vmatpush2.msra.mxu0 0.0
  %413 = vmatprep.subr.mxu0 0.0
  %414 = vmatpush2.msra.mxu0 0.0
  %415 = vmatprep.subr.mxu0 0.0
  %416 = vmatpush2.msra.mxu0 0.0
  %417 = vmatprep.subr.mxu0 0.0
  %418 = vmatpush2.msra.mxu0 0.0
  %419 = vmatprep.subr.mxu0 0.0
  %420 = vmatpush2.msra.mxu0 0.0
  %421 = vmatprep.subr.mxu0 0.0
  %422 = vmatpush2.msra.mxu0 0.0
  %423 = vmatprep.subr.mxu0 0.0
  %424 = vmatpush2.msra.mxu0 0.0
  %425 = vmatprep.subr.mxu0 0.0
  %426 = vmatpush2.msra.mxu0 0.0
  %427 = vmatprep.subr.mxu0 0.0
  %428 = vmatpush2.msra.mxu0 0.0
  %429 = vmatprep.subr.mxu0 0.0
  %430 = vmatpush2.msra.mxu0 0.0
  %431 = vmatprep.subr.mxu0 0.0
  %432 = vmatpush2.msra.mxu0 0.0
  %433 = vmatprep.subr.mxu0 0.0
  %434 = vmatpush2.msra.mxu0 0.0
  %435 = vmatprep.mubr.f32.mxu0 0.0
  %436 = vmatmul.mubr.f32.gmra.mxu0 %v348
  %v437 = vpop.f32.mrf.mxu0
  %v438 = vadd.f32 %v345, %v437
  %v439 = vpop.f32.mrf.mxu0
  %440 = vmatprep.mubr.f32.mxu0 0.0
  %441 = vmatmul.mubr.f32.gmra.mxu0 %v351
  %v442 = vpop.f32.mrf.mxu0
  %v443 = vadd.f32 %v345, %v442
  %v444 = vpop.f32.mrf.mxu0
  %445 = vmatprep.mubr.f32.mxu0 0.0
  %446 = vmatmul.mubr.f32.gmra.mxu0 %v354
  %v447 = vpop.f32.mrf.mxu0
  %v448 = vadd.f32 %v345, %v447
  %v449 = vpop.f32.mrf.mxu0
  %450 = vmatprep.mubr.f32.mxu0 0.0
  %451 = vmatmul.mubr.f32.gmra.mxu0 %v357
  %v452 = vpop.f32.mrf.mxu0
  %v453 = vadd.f32 %v345, %v452
  %v454 = vpop.f32.mrf.mxu0
  %455 = vmatprep.mubr.f32.mxu0 0.0
  %456 = vmatmul.mubr.f32.gmra.mxu0 %v360
  %v457 = vpop.f32.mrf.mxu0
  %v458 = vadd.f32 %v345, %v457
  %v459 = vpop.f32.mrf.mxu0
  %460 = vmatprep.mubr.f32.mxu0 0.0
  %461 = vmatmul.mubr.f32.gmra.mxu0 %v363
  %v462 = vpop.f32.mrf.mxu0
  %v463 = vadd.f32 %v345, %v462
  %v464 = vpop.f32.mrf.mxu0
  %465 = vmatprep.mubr.f32.mxu0 0.0
  %466 = vmatmul.mubr.f32.gmra.mxu0 %v366
  %v467 = vpop.f32.mrf.mxu0
  %v468 = vadd.f32 %v345, %v467
  %v469 = vpop.f32.mrf.mxu0
  %470 = vmatprep.mubr.f32.mxu0 0.0
  %471 = vmatmul.mubr.f32.gmra.mxu0 %v369
  %v472 = vpop.f32.mrf.mxu0
  %v473 = vadd.f32 %v345, %v472
  %v474 = vpop.f32.mrf.mxu0
  %475 = vdwg.mxu0
  %vm476 = vcmask 64512
  %477 = vst.msk [vmem:[%s7] sm:$0xff] %vm476, %v438
  %478 = vst.msk [vmem:[%s7 + $0x8] sm:$0xff] %vm476, %v443
  %479 = vst.msk [vmem:[%s7 + $0x10] sm:$0xff] %vm476, %v448
  %480 = vst.msk [vmem:[%s7 + $0x18] sm:$0xff] %vm476, %v453
  %481 = vst.msk [vmem:[%s7 + $0x20] sm:$0xff] %vm476, %v458
  %482 = vst.msk [vmem:[%s7 + $0x28] sm:$0xff] %vm476, %v463
  %483 = vst.msk [vmem:[%s7 + $0x30] sm:$0xff] %vm476, %v468
  %484 = vst.msk [vmem:[%s7 + $0x38] sm:$0xff] %vm476, %v473
  // Predicated region
  $region30: #{tpu_custom_call.1} parent=0 // pred_check
    _
  $region31: #{tpu_custom_call.1} parent=0 // pred_check_branch
    %486 = sbr.rel (0) target = $region33
  $region32: #{tpu_custom_call.1} parent=0 // pred_region
    _
  $region33: #{tpu_custom_call.1} parent=0 // pred_fallthru
    _
  // Predicated region
  $region34: #{tpu_custom_call.1} parent=0 // pred_check
    _
  $region35: #{tpu_custom_call.1} parent=0 // pred_check_branch
    %488 = sbr.rel (0) target = $region37
  $region36: #{tpu_custom_call.1} parent=0 // pred_region
    _
  $region37: #{tpu_custom_call.1} parent=0 // pred_fallthru
    _

</llo_original>
